<compile_context>
chip_gen: v5e
topology: v5e:2x2
jax: 0.10.0
libtpu: 0.0.40
codegen_flags: <defaults>
</compile_context>

<pallas_src>
import math

import jax
import jax.numpy as jnp
from jax.experimental import pallas as pl
from jax.experimental.pallas import tpu as pltpu


def intermediate_kernel(x_ref, w1_ref, b1_ref, w2_ref, b2_ref, g_ref, beta_ref, o_ref):
    # x tile in its native dtype -> straight to the MXU (no f32 upcast of operands).
    x = x_ref[...]                                                       # (TM, H)

    # dense_1: (TM, H) @ (H, 4H) + (4H,), f32 accumulation.
    h = jnp.dot(x, w1_ref[...], preferred_element_type=jnp.float32)
    h = h + b1_ref[...].astype(jnp.float32)

    # exact GELU (matches torch.erf reference): x * 0.5 * (1 + erf(x / sqrt(2)))
    h = h * 0.5 * (1.0 + jax.lax.erf(h * (1.0 / math.sqrt(2.0))))

    # dense_2: (TM, 4H) @ (4H, H) + (H,); cast activations to the weight dtype so
    # bf16 weights keep the MXU on the bf16 path, accumulate in f32.
    h = jnp.dot(h.astype(w2_ref.dtype), w2_ref[...],
                preferred_element_type=jnp.float32)
    h = h + b2_ref[...].astype(jnp.float32)

    # TODO(synk): dropout omitted (inference / eval mode -> identity).

    # residual + TF-style LayerNorm (eps inside sqrt, biased variance), f32 math.
    # axis=-1 reductions go to the XLU slot; rsqrt goes to the EUP slot.
    y = h + x.astype(jnp.float32)
    u = jnp.mean(y, axis=-1, keepdims=True)
    d = y - u
    s = jnp.mean(d * d, axis=-1, keepdims=True)
    yn = d * jax.lax.rsqrt(s + 1e-12)
    o_ref[...] = (g_ref[...].astype(jnp.float32) * yn
                  + beta_ref[...].astype(jnp.float32)).astype(o_ref.dtype)


def intermediate_forward(x, w1, b1, w2, b2, gamma, beta, *, block_m=256):
    """x: (B, S, H).  Returns (B, S, H)."""
    B, S, H = x.shape
    M = B * S
    H4 = w1.shape[1]
    x2 = x.reshape(M, H)

    # Row-tile size: multiple of 8 (256 preferred to feed the 2x256^2 MXU); if the
    # whole problem is smaller than one tile, use the full extent (always legal).
    tm = block_m if M >= block_m else M
    grid_m = pl.cdiv(M, tm)

    itemsize = jnp.dtype(x.dtype).itemsize
    cost = pl.CostEstimate(
        flops=2 * M * H * H4 * 2,                       # two matmuls
        transcendentals=M * H4,                          # erf per GELU element
        bytes_accessed=(2 * M * H) * itemsize            # x in + out
        + (w1.size * jnp.dtype(w1.dtype).itemsize)
        + (w2.size * jnp.dtype(w2.dtype).itemsize)
        + (b1.size + b2.size + gamma.size + beta.size) * itemsize,
    )

    out = pl.pallas_call(
        intermediate_kernel,
        out_shape=jax.ShapeDtypeStruct((M, H), x.dtype),
        grid=(grid_m,),
        in_specs=[
            pl.BlockSpec((tm, H), lambda i: (i, 0)),     # x: streamed row tiles
            pl.BlockSpec((H, H4), lambda i: (0, 0)),     # w1: resident
            pl.BlockSpec((1, H4), lambda i: (0, 0)),     # b1: resident
            pl.BlockSpec((H4, H), lambda i: (0, 0)),     # w2: resident
            pl.BlockSpec((1, H), lambda i: (0, 0)),      # b2: resident
            pl.BlockSpec((1, H), lambda i: (0, 0)),      # gamma: resident
            pl.BlockSpec((1, H), lambda i: (0, 0)),      # beta: resident
        ],
        out_specs=pl.BlockSpec((tm, H), lambda i: (i, 0)),
        compiler_params=pltpu.CompilerParams(
            dimension_semantics=("parallel",),           # shard row tiles on v7x 2xTC
            vmem_limit_bytes=64 * 1024 * 1024,
        ),
        cost_estimate=cost,
    )(x2, w1, b1.reshape(1, H4), w2, b2.reshape(1, H),
      gamma.reshape(1, H), beta.reshape(1, H))
    return out.reshape(B, S, H)


def reference_forward(x, w1, b1, w2, b2, gamma, beta):
    h = jnp.einsum("bsh,hf->bsf", x, w1) + b1
    h = h * 0.5 * (1.0 + jax.lax.erf(h / jnp.sqrt(2.0)))
    h = jnp.einsum("bsf,fh->bsh", h, w2) + b2
    y = h + x
    u = jnp.mean(y, axis=-1, keepdims=True)
    s = jnp.mean((y - u) ** 2, axis=-1, keepdims=True)
    yn = (y - u) / jnp.sqrt(s + 1e-12)
    return gamma * yn + beta


if __name__ == "__main__":
    B, S, H = 2, 8, 32
    H4 = H * 4

    key = jax.random.PRNGKey(0)
    kx, kw1, kb1, kw2, kb2 = jax.random.split(key, 5)

    x = jax.random.normal(kx, (B, S, H), dtype=jnp.float32)
    # deterministic synthetic parameters (nn.Linear-like scale)
    w1 = jax.random.normal(kw1, (H, H4), dtype=jnp.float32) * (1.0 / math.sqrt(H))
    b1 = jax.random.normal(kb1, (H4,), dtype=jnp.float32) * 0.02
    w2 = jax.random.normal(kw2, (H4, H), dtype=jnp.float32) * (1.0 / math.sqrt(H4))
    b2 = jax.random.normal(kb2, (H,), dtype=jnp.float32) * 0.02
    gamma = jnp.ones((H,), dtype=jnp.float32)
    beta = jnp.zeros((H,), dtype=jnp.float32)

    # block_m=8 at this tiny shape so the grid actually has multiple steps
    # (exercises the M-tiled pipeline); at real sizes the default 256 is used.
    out = intermediate_forward(x, w1, b1, w2, b2, gamma, beta, block_m=8)
    out = jax.block_until_ready(out)

    ref = reference_forward(x, w1, b1, w2, b2, gamma, beta)
    assert out.shape == (B, S, H)
    assert jnp.allclose(out, ref, atol=1e-4, rtol=1e-4), "mismatch vs reference"

    print("KERNEL_OK")
</pallas_src>

<mosaic_0001>
module attributes {stable_mosaic.version = 11 : i64} {
  func.func @intermediate_kernel(%arg0: i32, %arg1: memref<8x32xf32, #tpu.memory_space<vmem>>, %arg2: memref<32x128xf32, #tpu.memory_space<vmem>>, %arg3: memref<1x128xf32, #tpu.memory_space<vmem>>, %arg4: memref<128x32xf32, #tpu.memory_space<vmem>>, %arg5: memref<1x32xf32, #tpu.memory_space<vmem>>, %arg6: memref<1x32xf32, #tpu.memory_space<vmem>>, %arg7: memref<1x32xf32, #tpu.memory_space<vmem>>, %arg8: memref<8x32xf32, #tpu.memory_space<vmem>>) attributes {dimension_semantics = [#tpu.dimension_semantics<parallel>], iteration_bounds = array<i64: 2>, scalar_prefetch = 0 : i64, scratch_operands = 0 : i64, tpu.core_type = #tpu.core_type<tc>, window_params = [{transform_indices = @transform_0, window_bounds = array<i64: 8, 32>}, {pipeline_mode = #tpu.pipeline_mode<synchronous>, transform_indices = @transform_1, window_bounds = array<i64: 32, 128>}, {pipeline_mode = #tpu.pipeline_mode<synchronous>, transform_indices = @transform_2, window_bounds = array<i64: 1, 128>}, {pipeline_mode = #tpu.pipeline_mode<synchronous>, transform_indices = @transform_3, window_bounds = array<i64: 128, 32>}, {pipeline_mode = #tpu.pipeline_mode<synchronous>, transform_indices = @transform_4, window_bounds = array<i64: 1, 32>}, {pipeline_mode = #tpu.pipeline_mode<synchronous>, transform_indices = @transform_5, window_bounds = array<i64: 1, 32>}, {pipeline_mode = #tpu.pipeline_mode<synchronous>, transform_indices = @transform_6, window_bounds = array<i64: 1, 32>}, {transform_indices = @transform_7, window_bounds = array<i64: 8, 32>}]} {
    %c0 = arith.constant 0 : index
    %c0_0 = arith.constant 0 : index
    %0 = vector.load %arg1[%c0, %c0_0] : memref<8x32xf32, #tpu.memory_space<vmem>>, vector<8x32xf32>
    %c0_1 = arith.constant 0 : index
    %c0_2 = arith.constant 0 : index
    %1 = vector.load %arg2[%c0_1, %c0_2] : memref<32x128xf32, #tpu.memory_space<vmem>>, vector<32x128xf32>
    %cst = arith.constant dense<0.000000e+00> : vector<8x128xf32>
    %2 = tpu.matmul %0, %1, %cst {dimension_numbers = #tpu.dot_dimension_numbers<[1], [0], [0], [1], [0, 0, 1, 1], [], []>} : vector<8x32xf32>, vector<32x128xf32>, vector<8x128xf32> -> vector<8x128xf32>
    %c0_3 = arith.constant 0 : index
    %c0_4 = arith.constant 0 : index
    %3 = vector.load %arg3[%c0_3, %c0_4] : memref<1x128xf32, #tpu.memory_space<vmem>>, vector<1x128xf32>
    %4 = vector.broadcast %3 : vector<1x128xf32> to vector<8x128xf32>
    %5 = arith.addf %2, %4 : vector<8x128xf32>
    %cst_5 = arith.constant 5.000000e-01 : f32
    %6 = vector.broadcast %cst_5 : f32 to vector<8x128xf32>
    %7 = arith.mulf %5, %6 : vector<8x128xf32>
    %cst_6 = arith.constant 0.707106769 : f32
    %8 = vector.broadcast %cst_6 : f32 to vector<8x128xf32>
    %9 = arith.mulf %5, %8 : vector<8x128xf32>
    %10 = math.erf %9 : vector<8x128xf32>
    %cst_7 = arith.constant 1.000000e+00 : f32
    %11 = vector.broadcast %cst_7 : f32 to vector<8x128xf32>
    %12 = arith.addf %11, %10 : vector<8x128xf32>
    %13 = arith.mulf %7, %12 : vector<8x128xf32>
    %c0_8 = arith.constant 0 : index
    %c0_9 = arith.constant 0 : index
    %14 = vector.load %arg4[%c0_8, %c0_9] : memref<128x32xf32, #tpu.memory_space<vmem>>, vector<128x32xf32>
    %cst_10 = arith.constant dense<0.000000e+00> : vector<8x32xf32>
    %15 = tpu.matmul %13, %14, %cst_10 {dimension_numbers = #tpu.dot_dimension_numbers<[1], [0], [0], [1], [0, 0, 1, 1], [], []>} : vector<8x128xf32>, vector<128x32xf32>, vector<8x32xf32> -> vector<8x32xf32>
    %c0_11 = arith.constant 0 : index
    %c0_12 = arith.constant 0 : index
    %16 = vector.load %arg5[%c0_11, %c0_12] : memref<1x32xf32, #tpu.memory_space<vmem>>, vector<1x32xf32>
    %17 = vector.broadcast %16 : vector<1x32xf32> to vector<8x32xf32>
    %18 = arith.addf %15, %17 : vector<8x32xf32>
    %19 = arith.addf %18, %0 : vector<8x32xf32>
    %cst_13 = arith.constant dense<0.000000e+00> : vector<8xf32>
    %20 = vector.multi_reduction <add>, %19, %cst_13 [1] : vector<8x32xf32> to vector<8xf32>
    %21 = vector.shape_cast %20 : vector<8xf32> to vector<8x1xf32>
    %cst_14 = arith.constant 3.200000e+01 : f32
    %22 = vector.broadcast %cst_14 : f32 to vector<8x1xf32>
    %23 = arith.divf %21, %22 : vector<8x1xf32>
    %24 = vector.broadcast %23 : vector<8x1xf32> to vector<8x32xf32>
    %25 = arith.subf %19, %24 : vector<8x32xf32>
    %26 = arith.mulf %25, %25 : vector<8x32xf32>
    %cst_15 = arith.constant dense<0.000000e+00> : vector<8xf32>
    %27 = vector.multi_reduction <add>, %26, %cst_15 [1] : vector<8x32xf32> to vector<8xf32>
    %28 = vector.shape_cast %27 : vector<8xf32> to vector<8x1xf32>
    %cst_16 = arith.constant 3.200000e+01 : f32
    %29 = vector.broadcast %cst_16 : f32 to vector<8x1xf32>
    %30 = arith.divf %28, %29 : vector<8x1xf32>
    %cst_17 = arith.constant 9.99999996E-13 : f32
    %31 = vector.broadcast %cst_17 : f32 to vector<8x1xf32>
    %32 = arith.addf %30, %31 : vector<8x1xf32>
    %33 = math.rsqrt %32 : vector<8x1xf32>
    %34 = vector.broadcast %33 : vector<8x1xf32> to vector<8x32xf32>
    %35 = arith.mulf %25, %34 : vector<8x32xf32>
    %c0_18 = arith.constant 0 : index
    %c0_19 = arith.constant 0 : index
    %36 = vector.load %arg6[%c0_18, %c0_19] : memref<1x32xf32, #tpu.memory_space<vmem>>, vector<1x32xf32>
    %37 = vector.broadcast %36 : vector<1x32xf32> to vector<8x32xf32>
    %38 = arith.mulf %37, %35 : vector<8x32xf32>
    %c0_20 = arith.constant 0 : index
    %c0_21 = arith.constant 0 : index
    %39 = vector.load %arg7[%c0_20, %c0_21] : memref<1x32xf32, #tpu.memory_space<vmem>>, vector<1x32xf32>
    %40 = vector.broadcast %39 : vector<1x32xf32> to vector<8x32xf32>
    %41 = arith.addf %38, %40 : vector<8x32xf32>
    %c0_22 = arith.constant 0 : index
    %c0_23 = arith.constant 0 : index
    %42 = vector.load %arg8[%c0_22, %c0_23] : memref<8x32xf32, #tpu.memory_space<vmem>>, vector<8x32xf32>
    tpu.vector_store %arg8[%c0_22, %c0_23], %41 {strides = array<i32>} : memref<8x32xf32, #tpu.memory_space<vmem>>, vector<8x32xf32>,
    return
  }
  func.func @transform_0(%arg0: i32) -> (i32, i32) {
    %c0_i32 = arith.constant 0 : i32
    %c0_i32_0 = arith.constant 0 : i32
    return %arg0, %c0_i32 : i32, i32
  }
  func.func @transform_1(%arg0: i32) -> (i32, i32) {
    %c0_i32 = arith.constant 0 : i32
    %c0_i32_0 = arith.constant 0 : i32
    %c0_i32_1 = arith.constant 0 : i32
    return %c0_i32, %c0_i32_0 : i32, i32
  }
  func.func @transform_2(%arg0: i32) -> (i32, i32) {
    %c0_i32 = arith.constant 0 : i32
    %c0_i32_0 = arith.constant 0 : i32
    %c0_i32_1 = arith.constant 0 : i32
    return %c0_i32, %c0_i32_0 : i32, i32
  }
  func.func @transform_3(%arg0: i32) -> (i32, i32) {
    %c0_i32 = arith.constant 0 : i32
    %c0_i32_0 = arith.constant 0 : i32
    %c0_i32_1 = arith.constant 0 : i32
    return %c0_i32, %c0_i32_0 : i32, i32
  }
  func.func @transform_4(%arg0: i32) -> (i32, i32) {
    %c0_i32 = arith.constant 0 : i32
    %c0_i32_0 = arith.constant 0 : i32
    %c0_i32_1 = arith.constant 0 : i32
    return %c0_i32, %c0_i32_0 : i32, i32
  }
  func.func @transform_5(%arg0: i32) -> (i32, i32) {
    %c0_i32 = arith.constant 0 : i32
    %c0_i32_0 = arith.constant 0 : i32
    %c0_i32_1 = arith.constant 0 : i32
    return %c0_i32, %c0_i32_0 : i32, i32
  }
  func.func @transform_6(%arg0: i32) -> (i32, i32) {
    %c0_i32 = arith.constant 0 : i32
    %c0_i32_0 = arith.constant 0 : i32
    %c0_i32_1 = arith.constant 0 : i32
    return %c0_i32, %c0_i32_0 : i32, i32
  }
  func.func @transform_7(%arg0: i32) -> (i32, i32) {
    %c0_i32 = arith.constant 0 : i32
    %c0_i32_0 = arith.constant 0 : i32
    return %arg0, %c0_i32 : i32, i32
  }
}

</mosaic_0001>

<llo_original>
// kernel: tpu_custom_call.1
$region0: #{tpu_custom_call.1}
  #allocation0 [shape = 'u32[]', space=smem, size = 0x4, offset = 0x4, fixed_abs, tag = 'smem constant byte address 0x4 - core index']
  #allocation1 [shape = 'u32[72,128]{1,0:T(1,128)}', space=vmem, size = 0x9000, scoped, tag = 'internal scratch']
  %s0 = inlined_call_operand.vmem [shape: f32[16,32], index: 0, kind: input, shape index: {}]
  %s1 = inlined_call_operand.vmem [shape: f32[32,128], index: 1, kind: input, shape index: {}]
  %s2 = inlined_call_operand.vmem [shape: f32[1,128], index: 2, kind: input, shape index: {}]
  %s3 = inlined_call_operand.vmem [shape: f32[128,32], index: 3, kind: input, shape index: {}]
  %s4 = inlined_call_operand.vmem [shape: f32[1,32], index: 4, kind: input, shape index: {}]
  %s5 = inlined_call_operand.vmem [shape: f32[1,32], index: 5, kind: input, shape index: {}]
  %s6 = inlined_call_operand.vmem [shape: f32[1,32], index: 6, kind: input, shape index: {}]
  %s7 = inlined_call_operand.hbm [shape: f32[16,32], index: 7, kind: output, shape index: {}]
  %s8 = sld [smem:[#allocation0]]
  $region61: #{tpu_custom_call.1} parent=0
    _
  %s10 = ssub.s32 1, %s8
  %s11 = scalar_select 0, %s10, %s8
  $region1: #{tpu_custom_call.1} parent=0
    #allocation2 [shape = 'u8[8192]{0}', space=vmem, size = 0x2000, scoped, tag = 'output window, operand 0']
    #allocation3 [shape = 's32[2]{0}', space=sflag, size = 0x8, scoped, tag = 'scoped memory for tpu_custom_call.1']
    %12 = vsyncpa [#allocation3], 0
    %s13 = scalar_lea.sflag [#allocation3], 1
    %14 = vsyncpa %s13, 0
    loop: start=0, step=1, limit=4
    $region2: #{tpu_custom_call.1} parent=1 // loop_pre_header
      _
    $region3: #{tpu_custom_call.1} parent=1 // loop_header
      %s16 = sphi 0, %s20
      %p17 = scmp.ge.s32.totalorder %s16, 4
      %s26 = sphi 0, %s28
      %s29 = sphi 0, %s26
      %s30 = sphi 0, %s29
      %s46 = sphi 0, %s30
      %s50 = sphi 0, %s50
      %s52 = sphi 0, %s50
      %s53 = sphi 0, %s52
      %s67 = sphi 0, %s53
      %s71 = sphi 0, %s71
      %s73 = sphi 0, %s71
      %s74 = sphi 0, %s73
      %s88 = sphi 0, %s74
      %s92 = sphi 0, %s92
      %s94 = sphi 0, %s92
      %s95 = sphi 0, %s94
      %s109 = sphi 0, %s95
      %s113 = sphi 0, %s113
      %s115 = sphi 0, %s113
      %s116 = sphi 0, %s115
      %s130 = sphi 0, %s116
      %s134 = sphi 0, %s134
      %s136 = sphi 0, %s134
      %s137 = sphi 0, %s136
      %s151 = sphi 0, %s137
      %s155 = sphi 0, %s155
      %s157 = sphi 0, %s155
      %s158 = sphi 0, %s157
      %s172 = sphi 0, %s158
      %s178 = sphi 0, %s180
      %s181 = sphi 0, %s178
      %s182 = sphi 0, %s181
      %s198 = sphi 0, %s182
    $region4: #{tpu_custom_call.1} parent=1 // loop_header_branch
      %19 = sbr.rel (%p17) target = $region8
    $region5: #{tpu_custom_call.1} parent=1 // loop_body
      %s21 = ssub.s32 %s16, 1
      %s22 = ssub.s32 %s16, 2
      %s23 = sadd.s32 %s16, 1
      %s24 = ssub.s32 %s16, %s23
      %p25 = scmp.eq.s32.totalorder %s24, 0
      %s27 = sadd.s32 %s26, 1
      %s28 = scalar_select %p25, %s26, %s27
      %p31 = pneg %p25
      %p32 = scmp.eq.s32.totalorder %s16, 1
      %p33 = por %p31, %p32
      %p34 = scmp.ne.s32.totalorder %s26, %s29
      %p35 = scmp.eq.s32.totalorder %s16, 0
      %p36 = por %p34, %p35
      %p37 = scmp.ne.s32.totalorder %s26, %s29
      %p38 = scmp.eq.s32.totalorder %s21, 1
      %p39 = por %p37, %p38
      %p40 = scmp.ne.s32.totalorder %s29, %s30
      %p41 = scmp.eq.s32.totalorder %s21, 0
      %p42 = por %p40, %p41
      %p43 = scmp.ne.s32.totalorder %s29, %s30
      %p44 = scmp.eq.s32.totalorder %s22, 1
      %p45 = por %p43, %p44
      %p47 = scmp.ne.s32.totalorder %s30, %s46
      %p48 = scmp.eq.s32.totalorder %s22, 0
      %p49 = por %p47, %p48
      %s51 = sadd.s32 %s50, 1
      %p54 = scmp.eq.s32.totalorder %s16, 1
      %p55 = scmp.ne.s32.totalorder %s50, %s52
      %p56 = scmp.eq.s32.totalorder %s16, 0
      %p57 = por %p55, %p56
      %p58 = scmp.ne.s32.totalorder %s50, %s52
      %p59 = scmp.eq.s32.totalorder %s21, 1
      %p60 = por %p58, %p59
      %p61 = scmp.ne.s32.totalorder %s52, %s53
      %p62 = scmp.eq.s32.totalorder %s21, 0
      %p63 = por %p61, %p62
      %p64 = scmp.ne.s32.totalorder %s52, %s53
      %p65 = scmp.eq.s32.totalorder %s22, 1
      %p66 = por %p64, %p65
      %p68 = scmp.ne.s32.totalorder %s53, %s67
      %p69 = scmp.eq.s32.totalorder %s22, 0
      %p70 = por %p68, %p69
      %s72 = sadd.s32 %s71, 1
      %p75 = scmp.eq.s32.totalorder %s16, 1
      %p76 = scmp.ne.s32.totalorder %s71, %s73
      %p77 = scmp.eq.s32.totalorder %s16, 0
      %p78 = por %p76, %p77
      %p79 = scmp.ne.s32.totalorder %s71, %s73
      %p80 = scmp.eq.s32.totalorder %s21, 1
      %p81 = por %p79, %p80
      %p82 = scmp.ne.s32.totalorder %s73, %s74
      %p83 = scmp.eq.s32.totalorder %s21, 0
      %p84 = por %p82, %p83
      %p85 = scmp.ne.s32.totalorder %s73, %s74
      %p86 = scmp.eq.s32.totalorder %s22, 1
      %p87 = por %p85, %p86
      %p89 = scmp.ne.s32.totalorder %s74, %s88
      %p90 = scmp.eq.s32.totalorder %s22, 0
      %p91 = por %p89, %p90
      %s93 = sadd.s32 %s92, 1
      %p96 = scmp.eq.s32.totalorder %s16, 1
      %p97 = scmp.ne.s32.totalorder %s92, %s94
      %p98 = scmp.eq.s32.totalorder %s16, 0
      %p99 = por %p97, %p98
      %p100 = scmp.ne.s32.totalorder %s92, %s94
      %p101 = scmp.eq.s32.totalorder %s21, 1
      %p102 = por %p100, %p101
      %p103 = scmp.ne.s32.totalorder %s94, %s95
      %p104 = scmp.eq.s32.totalorder %s21, 0
      %p105 = por %p103, %p104
      %p106 = scmp.ne.s32.totalorder %s94, %s95
      %p107 = scmp.eq.s32.totalorder %s22, 1
      %p108 = por %p106, %p107
      %p110 = scmp.ne.s32.totalorder %s95, %s109
      %p111 = scmp.eq.s32.totalorder %s22, 0
      %p112 = por %p110, %p111
      %s114 = sadd.s32 %s113, 1
      %p117 = scmp.eq.s32.totalorder %s16, 1
      %p118 = scmp.ne.s32.totalorder %s113, %s115
      %p119 = scmp.eq.s32.totalorder %s16, 0
      %p120 = por %p118, %p119
      %p121 = scmp.ne.s32.totalorder %s113, %s115
      %p122 = scmp.eq.s32.totalorder %s21, 1
      %p123 = por %p121, %p122
      %p124 = scmp.ne.s32.totalorder %s115, %s116
      %p125 = scmp.eq.s32.totalorder %s21, 0
      %p126 = por %p124, %p125
      %p127 = scmp.ne.s32.totalorder %s115, %s116
      %p128 = scmp.eq.s32.totalorder %s22, 1
      %p129 = por %p127, %p128
      %p131 = scmp.ne.s32.totalorder %s116, %s130
      %p132 = scmp.eq.s32.totalorder %s22, 0
      %p133 = por %p131, %p132
      %s135 = sadd.s32 %s134, 1
      %p138 = scmp.eq.s32.totalorder %s16, 1
      %p139 = scmp.ne.s32.totalorder %s134, %s136
      %p140 = scmp.eq.s32.totalorder %s16, 0
      %p141 = por %p139, %p140
      %p142 = scmp.ne.s32.totalorder %s134, %s136
      %p143 = scmp.eq.s32.totalorder %s21, 1
      %p144 = por %p142, %p143
      %p145 = scmp.ne.s32.totalorder %s136, %s137
      %p146 = scmp.eq.s32.totalorder %s21, 0
      %p147 = por %p145, %p146
      %p148 = scmp.ne.s32.totalorder %s136, %s137
      %p149 = scmp.eq.s32.totalorder %s22, 1
      %p150 = por %p148, %p149
      %p152 = scmp.ne.s32.totalorder %s137, %s151
      %p153 = scmp.eq.s32.totalorder %s22, 0
      %p154 = por %p152, %p153
      %s156 = sadd.s32 %s155, 1
      %p159 = scmp.eq.s32.totalorder %s16, 1
      %p160 = scmp.ne.s32.totalorder %s155, %s157
      %p161 = scmp.eq.s32.totalorder %s16, 0
      %p162 = por %p160, %p161
      %p163 = scmp.ne.s32.totalorder %s155, %s157
      %p164 = scmp.eq.s32.totalorder %s21, 1
      %p165 = por %p163, %p164
      %p166 = scmp.ne.s32.totalorder %s157, %s158
      %p167 = scmp.eq.s32.totalorder %s21, 0
      %p168 = por %p166, %p167
      %p169 = scmp.ne.s32.totalorder %s157, %s158
      %p170 = scmp.eq.s32.totalorder %s22, 1
      %p171 = por %p169, %p170
      %p173 = scmp.ne.s32.totalorder %s158, %s172
      %p174 = scmp.eq.s32.totalorder %s22, 0
      %p175 = por %p173, %p174
      %s176 = ssub.s32 %s16, %s23
      %p177 = scmp.eq.s32.totalorder %s176, 0
      %s179 = sadd.s32 %s178, 1
      %s180 = scalar_select %p177, %s178, %s179
      %p183 = pneg %p177
      %p184 = scmp.eq.s32.totalorder %s16, 1
      %p185 = por %p183, %p184
      %p186 = scmp.ne.s32.totalorder %s178, %s181
      %p187 = scmp.eq.s32.totalorder %s16, 0
      %p188 = por %p186, %p187
      %p189 = scmp.ne.s32.totalorder %s178, %s181
      %p190 = scmp.eq.s32.totalorder %s21, 1
      %p191 = por %p189, %p190
      %p192 = scmp.ne.s32.totalorder %s181, %s182
      %p193 = scmp.eq.s32.totalorder %s21, 0
      %p194 = por %p192, %p193
      %p195 = scmp.ne.s32.totalorder %s181, %s182
      %p196 = scmp.eq.s32.totalorder %s22, 1
      %p197 = por %p195, %p196
      %p199 = scmp.ne.s32.totalorder %s182, %s198
      %p200 = scmp.eq.s32.totalorder %s22, 0
      %p201 = por %p199, %p200
      %p202 = scmp.le.s32.totalorder 1, %s16
      %p203 = scmp.lt.s32.totalorder %s16, 3
      %p204 = pnand %p202, %p203
      %p205 = pneg %p204
      // Predicated region
      $region9: #{tpu_custom_call.1} parent=5 // pred_check
        _
      $region10: #{tpu_custom_call.1} parent=5 // pred_check_branch
        %207 = sbr.rel (%p204) target = $region12
      $region11: #{tpu_custom_call.1} parent=5 // pred_region
        %s208 = ssub.s32 %s16, 1
        // Predicated region
        $region13: #{tpu_custom_call.1} parent=11 // pred_check
          %p209 = pneg %p63
        $region14: #{tpu_custom_call.1} parent=11 // pred_check_branch
          %211 = sbr.rel (%p209) target = $region16
        $region15: #{tpu_custom_call.1} parent=11 // pred_region
          _
        $region16: #{tpu_custom_call.1} parent=11 // pred_fallthru
          _
        // Predicated region
        $region17: #{tpu_custom_call.1} parent=11 // pred_check
          %p212 = pneg %p84
        $region18: #{tpu_custom_call.1} parent=11 // pred_check_branch
          %214 = sbr.rel (%p212) target = $region20
        $region19: #{tpu_custom_call.1} parent=11 // pred_region
          _
        $region20: #{tpu_custom_call.1} parent=11 // pred_fallthru
          _
        // Predicated region
        $region21: #{tpu_custom_call.1} parent=11 // pred_check
          %p215 = pneg %p105
        $region22: #{tpu_custom_call.1} parent=11 // pred_check_branch
          %217 = sbr.rel (%p215) target = $region24
        $region23: #{tpu_custom_call.1} parent=11 // pred_region
          _
        $region24: #{tpu_custom_call.1} parent=11 // pred_fallthru
          _
        // Predicated region
        $region25: #{tpu_custom_call.1} parent=11 // pred_check
          %p218 = pneg %p126
        $region26: #{tpu_custom_call.1} parent=11 // pred_check_branch
          %220 = sbr.rel (%p218) target = $region28
        $region27: #{tpu_custom_call.1} parent=11 // pred_region
          _
        $region28: #{tpu_custom_call.1} parent=11 // pred_fallthru
          _
        // Predicated region
        $region29: #{tpu_custom_call.1} parent=11 // pred_check
          %p221 = pneg %p147
        $region30: #{tpu_custom_call.1} parent=11 // pred_check_branch
          %223 = sbr.rel (%p221) target = $region32
        $region31: #{tpu_custom_call.1} parent=11 // pred_region
          _
        $region32: #{tpu_custom_call.1} parent=11 // pred_fallthru
          _
        // Predicated region
        $region33: #{tpu_custom_call.1} parent=11 // pred_check
          %p224 = pneg %p168
        $region34: #{tpu_custom_call.1} parent=11 // pred_check_branch
          %226 = sbr.rel (%p224) target = $region36
        $region35: #{tpu_custom_call.1} parent=11 // pred_region
          _
        $region36: #{tpu_custom_call.1} parent=11 // pred_fallthru
          _
      $region12: #{tpu_custom_call.1} parent=5 // pred_fallthru
        _
      %p227 = scmp.lt.s32.totalorder %s16, 2
      // Predicated region
      $region37: #{tpu_custom_call.1} parent=5 // pred_check
        %p228 = pneg %p227
      $region38: #{tpu_custom_call.1} parent=5 // pred_check_branch
        %230 = sbr.rel (%p228) target = $region40
      $region39: #{tpu_custom_call.1} parent=5 // pred_region
        // Predicated region
        $region41: #{tpu_custom_call.1} parent=39 // pred_check
          %p231 = pneg %p36
        $region42: #{tpu_custom_call.1} parent=39 // pred_check_branch
          %233 = sbr.rel (%p231) target = $region44
        $region43: #{tpu_custom_call.1} parent=39 // pred_region
          %p234 = scmp.lt.s32.totalorder %s16, 1
          %s235 = scalar_select %p234, %s16, 1
          %s236 = smul.addr %s235, 8
          %s237 = scalar_lea.vmem %s0, %s236
        $region44: #{tpu_custom_call.1} parent=39 // pred_fallthru
          _
      $region40: #{tpu_custom_call.1} parent=5 // pred_fallthru
        _
      %p238 = scmp.le.s32.totalorder 1, %s16
      %p239 = scmp.lt.s32.totalorder %s16, 3
      %p240 = pnand %p238, %p239
      %p241 = pneg %p240
      // Predicated region
      $region45: #{tpu_custom_call.1} parent=5 // pred_check
        _
      $region46: #{tpu_custom_call.1} parent=5 // pred_check_branch
        %243 = sbr.rel (%p240) target = $region48
      $region47: #{tpu_custom_call.1} parent=5 // pred_region
        %s244 = ssub.s32 %s16, 1
        %p245 = scmp.lt.s32.totalorder %s21, 1
        %s246 = scalar_select %p245, %s21, 1
        %s247 = smul.addr %s246, 8
        %s248 = scalar_lea.vmem %s0, %s247
        %p249 = pneg %p42
        %p250 = pneg %p39
        %p251 = pneg %p63
        %p252 = pneg %p60
        %p253 = pneg %p84
        %p254 = pneg %p81
        %p255 = pneg %p105
        %p256 = pneg %p102
        %p257 = pneg %p126
        %p258 = pneg %p123
        %p259 = pneg %p147
        %p260 = pneg %p144
        %p261 = pneg %p168
        %p262 = pneg %p165
        %p263 = pneg %p194
        %p264 = pneg %p191
        %s265 = sand.u32 %s181, 1
        %s266 = scalar_lea.sflag [#allocation3], %s265
        %s267 = sand.u32 %s181, 1
        %s268 = smul.addr %s267, 8
        %s269 = scalar_lea.vmem [#allocation2], %s268
        %p270 = scmp.lt.s32.totalorder %s21, 1
        %s271 = scalar_select %p270, %s21, 1
        %s272 = smul.addr %s271, 8
        %s273 = scalar_lea.vmem %s0, %s272
        %v274 = vld [vmem:[%s273] sm:$0xff]
        %v275 = vld [vmem:[%s1] sm:$0xff]
        %v276 = vld [vmem:[%s1 + $0x8] sm:$0xff]
        %v277 = vld [vmem:[%s1 + $0x10] sm:$0xff]
        %v278 = vld [vmem:[%s1 + $0x18] sm:$0xff]
        %v279 = vld [vmem:[%s2] sm:$0x1]
        %v281 = vperm.slane %v279, 0
        %vm283 = vcmask 261120
        %v285 = vsel %vm283, %v274, 0
        %287 = vmatpush.msra.mxu0 0.0
        %288 = vmatpush.msra.mxu0 0.0
        %289 = vmatpush.msra.mxu0 0.0
        %290 = vmatpush.msra.mxu0 0.0
        %291 = vmatpush.msra.mxu0 0.0
        %292 = vmatpush.msra.mxu0 0.0
        %293 = vmatpush.msra.mxu0 0.0
        %294 = vmatpush.msra.mxu0 0.0
        %295 = vmatpush.msra.mxu0 0.0
        %296 = vmatpush.msra.mxu0 0.0
        %297 = vmatpush.msra.mxu0 0.0
        %298 = vmatpush.msra.mxu0 0.0
        %299 = vmatpush.msra.mxu0 %v278
        %300 = vmatpush.msra.mxu0 %v277
        %301 = vmatpush.msra.mxu0 %v276
        %302 = vmatpush.msra.mxu0 %v275
        %303 = vmatmul.f32.gmra.mxu0 %v285
        %v304 = vpop.f32.mrf.mxu0
        %v305 = vadd.f32 %v281, %v304
        %306 = vdwg.mxu0
        %v307 = vmul.f32 %v305, 0.5
        %v308 = vmul.f32 %v305, 0.70710677
        %v309 = vmul.f32 %v308, %v308
        %v310 = vmin.f32 16.0, %v309
        %v311 = vmul.f32 %v310, 2.1237322e-06
        %v312 = vadd.f32 %v311, 0.00028619796
        %v313 = vmul.f32 %v310, %v312
        %v314 = vadd.f32 %v313, 0.0036580483
        %v315 = vmul.f32 %v310, %v314
        %v316 = vadd.f32 %v315, 0.05243302
        %v317 = vmul.f32 %v310, %v316
        %v318 = vadd.f32 %v317, 0.18741608
        %v319 = vmul.f32 %v310, %v318
        %v320 = vadd.f32 %v319, 1.1283791
        %v321 = vmul.f32 %v308, %v320
        %v322 = vmul.f32 %v310, 3.8918573e-05
        %v323 = vadd.f32 %v322, 0.001143296
        %v324 = vmul.f32 %v310, %v323
        %v325 = vadd.f32 %v324, 0.014752088
        %v326 = vmul.f32 %v310, %v325
        %v327 = vadd.f32 %v326, 0.112945676
        %v328 = vmul.f32 %v310, %v327
        %v329 = vadd.f32 %v328, 0.4994258
        %v330 = vmul.f32 %v310, %v329
        %v331 = vadd.f32 %v330, 1.0
        %v332 = vrcp.pop %v331
        %v333 = vmul.f32 %v331, %v332
        %v334 = vsub.f32 1.0, %v333
        %v335 = vmul.f32 %v332, %v334
        %v336 = vadd.f32 %v332, %v335
        %vm337 = vweird.f32 %v331
        %vm338 = vweird.f32 %v332
        %vm339 = vmor %vm337, %vm338
        %v340 = vsel %vm339, %v332, %v336
        %v341 = vand.u32 2147483647, %v331
        %vm342 = vcmp.eq.f32.partialorder %v341, 8.507059e+37
        %v343 = vand.u32 %v331, 2147483648
        %v344 = vor.u32 1.1754944e-38, %v343
        %v345 = vsel %vm342, %v344, %v340
        %v346 = vmul.f32 %v321, %v345
        %v347 = vmin.f32 %v346, 1.0
        %v348 = vmax.f32 %v347, -1.0
        %v349 = vadd.f32 %v348, 1.0
        %v350 = vmul.f32 %v307, %v349
        %v351 = vld [vmem:[%s3] sm:$0xff]
        %v352 = vld [vmem:[%s3 + $0x8] sm:$0xff]
        %v353 = vld [vmem:[%s3 + $0x10] sm:$0xff]
        %v354 = vld [vmem:[%s3 + $0x18] sm:$0xff]
        %v355 = vld [vmem:[%s3 + $0x20] sm:$0xff]
        %v356 = vld [vmem:[%s3 + $0x28] sm:$0xff]
        %v357 = vld [vmem:[%s3 + $0x30] sm:$0xff]
        %v358 = vld [vmem:[%s3 + $0x38] sm:$0xff]
        %v359 = vld [vmem:[%s3 + $0x40] sm:$0xff]
        %v360 = vld [vmem:[%s3 + $0x48] sm:$0xff]
        %v361 = vld [vmem:[%s3 + $0x50] sm:$0xff]
        %v362 = vld [vmem:[%s3 + $0x58] sm:$0xff]
        %v363 = vld [vmem:[%s3 + $0x60] sm:$0xff]
        %v364 = vld [vmem:[%s3 + $0x68] sm:$0xff]
        %v365 = vld [vmem:[%s3 + $0x70] sm:$0xff]
        %v366 = vld [vmem:[%s3 + $0x78] sm:$0xff]
        %v367 = vld [vmem:[%s4] sm:$0x1]
        %v369 = vperm.slane %v367, 0
        %371 = vmatpush.msra.mxu0 %v366
        %372 = vmatpush.msra.mxu0 %v365
        %373 = vmatpush.msra.mxu0 %v364
        %374 = vmatpush.msra.mxu0 %v363
        %375 = vmatpush.msra.mxu0 %v362
        %376 = vmatpush.msra.mxu0 %v361
        %377 = vmatpush.msra.mxu0 %v360
        %378 = vmatpush.msra.mxu0 %v359
        %379 = vmatpush.msra.mxu0 %v358
        %380 = vmatpush.msra.mxu0 %v357
        %381 = vmatpush.msra.mxu0 %v356
        %382 = vmatpush.msra.mxu0 %v355
        %383 = vmatpush.msra.mxu0 %v354
        %384 = vmatpush.msra.mxu0 %v353
        %385 = vmatpush.msra.mxu0 %v352
        %386 = vmatpush.msra.mxu0 %v351
        %387 = vmatmul.f32.gmra.mxu0 %v350
        %v388 = vpop.f32.mrf.mxu0
        %v389 = vadd.f32 %v369, %v388
        %390 = vdwg.mxu0
        %v391 = vadd.f32 %v389, %v274
        %v392 = vsel %vm283, %v391, 0.0
        %393 = vadd.xlane.f32.xlu0 %v392
        %v394 = vpop.xlane.xlu0 %393
        %v395 = vrcp.pop 32.0
        %v396 = vmul.f32 32.0, %v395
        %v397 = vsub.f32 1.0, %v396
        %v398 = vmul.f32 %v395, %v397
        %v399 = vadd.f32 %v395, %v398
        %vm400 = vweird.f32 %v395
        %v401 = vsel %vm400, %v395, %v399
        %v402 = vmul.f32 %v394, %v401
        %v403 = vsub.f32 %v391, %v402
        %v404 = vmul.f32 %v403, %v403
        %v405 = vsel %vm283, %v404, 0.0
        %406 = vadd.xlane.f32.xlu0 %v405
        %v407 = vpop.xlane.xlu0 %406
        %v408 = vmul.f32 %v407, %v401
        %v409 = vadd.f32 %v408, 1e-12
        %v410 = vrsqrt.pop %v409
        %v411 = vmul.f32 %v410, %v409
        %v412 = vmul.f32 %v411, %v410
        %v413 = vmul.f32 0.5, %v412
        %v414 = vsub.f32 1.5, %v413
        %v415 = vmul.f32 %v410, %v414
        %vm416 = vweird.f32 %v409
        %vm417 = vweird.f32 %v410
        %vm418 = vmor %vm416, %vm417
        %v419 = vsel %vm418, %v410, %v415
        %v420 = vmul.f32 %v403, %v419
        %v421 = vld [vmem:[%s5] sm:$0x1]
        %v423 = vperm.slane %v421, 0
        %v425 = vmul.f32 %v423, %v420
        %v426 = vld [vmem:[%s6] sm:$0x1]
        %v428 = vperm.slane %v426, 0
        %v430 = vadd.f32 %v425, %v428
        %431 = vst.msk [vmem:[%s269] sm:$0xff] %vm283, %v430
        %s432 = sand.u32 %s181, 1
        %s433 = scalar_lea.sflag [#allocation3], %s432
        %s434 = sand.u32 %s181, 1
        %s435 = smul.addr %s434, 8
        %s436 = scalar_lea.vmem [#allocation2], %s435
        // Predicated region
        $region49: #{tpu_custom_call.1} parent=47 // pred_check
          %p437 = pneg %p191
        $region50: #{tpu_custom_call.1} parent=47 // pred_check_branch
          %439 = sbr.rel (%p437) target = $region52
        $region51: #{tpu_custom_call.1} parent=47 // pred_region
          %441 = vsyncadd %s433, 0
          %s442 = smul.addr %s21, 8
          %s443 = scalar_lea.hbm %s7, %s442
          %s445 = sshll.u32 %s436, 4
          %s446 = int_to_ptr.vmem [resolvable:$true] %s445
          %s447 = sshll.u32 %s443, 4
          %s448 = int_to_ptr.hbm [resolvable:$true] %s447
          %450 = dma.vmem_to_hbm [thread:$0]  %s446, 128, %s448, %s433
        $region52: #{tpu_custom_call.1} parent=47 // pred_fallthru
          _
      $region48: #{tpu_custom_call.1} parent=5 // pred_fallthru
        _
      %p451 = scmp.le.s32.totalorder 2, %s16
      // Predicated region
      $region53: #{tpu_custom_call.1} parent=5 // pred_check
        %p452 = pneg %p451
      $region54: #{tpu_custom_call.1} parent=5 // pred_check_branch
        %454 = sbr.rel (%p452) target = $region56
      $region55: #{tpu_custom_call.1} parent=5 // pred_region
        %s455 = ssub.s32 %s16, 2
        // Predicated region
        $region57: #{tpu_custom_call.1} parent=55 // pred_check
          %p456 = pneg %p197
        $region58: #{tpu_custom_call.1} parent=55 // pred_check_branch
          %458 = sbr.rel (%p456) target = $region60
        $region59: #{tpu_custom_call.1} parent=55 // pred_region
          %s459 = sand.u32 %s182, 1
          %s460 = scalar_lea.sflag [#allocation3], %s459
          %s461 = sand.u32 %s182, 1
          %s462 = smul.addr %s461, 8
          %s463 = scalar_lea.vmem [#allocation2], %s462
          %465 = dma.done %s460, 128
        $region60: #{tpu_custom_call.1} parent=55 // pred_fallthru
          _
      $region56: #{tpu_custom_call.1} parent=5 // pred_fallthru
        _
    $region6: #{tpu_custom_call.1} parent=1 // loop_footer
      %s20 = sadd.s32 1, %s16
    $region7: #{tpu_custom_call.1} parent=1 // loop_footer_branch
      %15 = sbr.rel target = $region3
    $region8: #{tpu_custom_call.1} parent=1 // loop_exit
      _
    %466 = vsyncpa [#allocation3], 1
    %s467 = scalar_lea.sflag [#allocation3], 1
    %468 = vsyncpa %s467, 1

</llo_original>
